<compile_context>
chip_gen: v6e
topology: v6e:2x2x1
jax: 0.10.0
libtpu: 0.0.40
codegen_flags: <defaults>
</compile_context>

<pallas_src>
import jax
import jax.numpy as jnp
import numpy as np
from jax.experimental import pallas as pl
from jax.experimental.pallas import tpu as pltpu

# ----------------------------- problem sizes (small, consistent with the module) -----
B = 2              # batch
CIN = 32           # word_dim  (Conv1d in_channels)
L = 16             # sequence length
K = 3              # kernel_size
COUT = 12          # out_dim   (Conv1d out_channels)
CONV1D_OUT = 16    # conv_1d_out_dim (Linear out features)

PAD = (K - 1) // 2
LOUT = L + 2 * PAD - K + 1       # conv output length (== L for odd K)
CPRIME = COUT // K               # channels after MaxPool2d((K,1)) == Linear in_features
QG = LOUT // CPRIME              # reshape-rows contributed per (batch, pooled-channel)
ROWS = B * LOUT                  # rows after reshape(-1, CPRIME)
NCOL = B * QG * CONV1D_OUT       # kernel-output lane width (== 128 here)

assert COUT % K == 0
assert LOUT % CPRIME == 0        # required for the fused block-diagonal linear trick


# ----------------------------- fused kernel -------------------------------------------
def cnn1d_fused_kernel(x_ref, wcolp_ref, bconv_ref, wexp_ref, blin_ref, out_ref, xcol_ref):
    # x_ref    : (B, CIN, L)          unpadded input, PyTorch NCW layout
    # wcolp_ref: (COUT, K*CIN)        im2col conv weight, rows permuted to [tap, pooled-ch]
    # bconv_ref: (COUT, 1)            conv bias (same row permutation)
    # wexp_ref : (B*LOUT, NCOL)       block-diagonal expanded linear weight
    # blin_ref : (1, NCOL)            linear bias tiled over the B*QG column blocks
    # out_ref  : (CPRIME, NCOL)       fused result, 128-lane dense
    # xcol_ref : VMEM scratch (K*CIN, B*LOUT) im2col matrix (zero fill == conv padding)

    # ---- build im2col matrix in-kernel (zero fill realizes the conv zero padding) ----
    xcol_ref[...] = jnp.zeros((K * CIN, B * LOUT), jnp.float32)
    for k in range(K):                                   # static unroll, K = 3
        lo = max(0, PAD - k)                             # valid output-position range
        hi = min(LOUT, L + PAD - k)
        src = lo - (PAD - k)                             # matching input start
        if hi > lo:
            for b in range(B):                           # static unroll, B = 2
                xcol_ref[k * CIN:(k + 1) * CIN,
                         b * LOUT + lo: b * LOUT + hi] = x_ref[b, :, src: src + (hi - lo)]

    # ---- Conv1d == ONE im2col MXU matmul over the whole batch ----
    acc = jnp.dot(wcolp_ref[...], xcol_ref[...],
                  preferred_element_type=jnp.float32)    # (COUT, B*LOUT)
    acc = jnp.maximum(acc + bconv_ref[...], 0.0)         # conv bias + ReLU

    # ---- MaxPool2d((K,1)) over channel groups ----
    # rows are ordered [tap j major, pooled channel c minor] => pooled channel c is the
    # elementwise max over K contiguous CPRIME-row slabs.
    m = acc[0:CPRIME, :]
    for j in range(1, K):
        m = jnp.maximum(m, acc[j * CPRIME:(j + 1) * CPRIME, :])   # (CPRIME, B*LOUT)

    # ---- fused "reshape(-1, CPRIME) -> Linear -> ReLU" via block-diagonal weight ----
    z = jnp.dot(m, wexp_ref[...], preferred_element_type=jnp.float32)   # (CPRIME, NCOL)
    out_ref[...] = jnp.maximum(z + blin_ref[...], 0.0)


# ----------------------------- wrapper -------------------------------------------------
def cnn_1d_forward(x, conv_w, conv_b, lin_w, lin_b):
    """x: (B, CIN, L) float32 (PyTorch NCW).  Returns (B*LOUT, CONV1D_OUT)."""
    # One-off parameter repacking (tiny, weight-side only).
    # Row permutation: new row j*CPRIME + c  <-  output channel c*K + j.
    perm = jnp.array([c * K + j for j in range(K) for c in range(CPRIME)], dtype=jnp.int32)
    wcol = jnp.transpose(conv_w, (0, 2, 1)).reshape(COUT, K * CIN)   # Wcol[o, k*CIN+i] = W[o,i,k]
    wcolp = wcol[perm]                                               # (COUT, K*CIN)
    bconvp = conv_b[perm].reshape(COUT, 1)
    # Wexp[(b*QG+q)*CPRIME + j, (b*QG+q)*CONV1D_OUT + o] = lin_w[o, j]  (block-diagonal)
    wexp = jnp.kron(jnp.eye(B * QG, dtype=jnp.float32), lin_w.T)     # (B*LOUT, NCOL)
    blin = jnp.tile(lin_b, (B * QG,)).reshape(1, NCOL)

    z = pl.pallas_call(
        cnn1d_fused_kernel,
        out_shape=jax.ShapeDtypeStruct((CPRIME, NCOL), jnp.float32),
        grid=(1,),
        in_specs=[
            pl.BlockSpec((B, CIN, L), lambda i: (0, 0, 0)),
            pl.BlockSpec((COUT, K * CIN), lambda i: (0, 0)),
            pl.BlockSpec((COUT, 1), lambda i: (0, 0)),
            pl.BlockSpec((B * LOUT, NCOL), lambda i: (0, 0)),
            pl.BlockSpec((1, NCOL), lambda i: (0, 0)),
        ],
        out_specs=pl.BlockSpec((CPRIME, NCOL), lambda i: (0, 0)),
        scratch_shapes=[pltpu.VMEM((K * CIN, B * LOUT), jnp.float32)],
        compiler_params=pltpu.CompilerParams(dimension_semantics=("arbitrary",)),
    )(x, wcolp, bconvp, wexp, blin)                                  # (CPRIME, NCOL)

    # z[c, (b*QG+q)*O + o]  ->  rows ordered (b, c, q): exactly torch's
    # `output.reshape(-1, output.size(1))` ordering followed by the Linear.
    return (z.reshape(CPRIME, B, QG, CONV1D_OUT)
             .transpose(1, 0, 2, 3)
             .reshape(ROWS, CONV1D_OUT))


# ----------------------------- pure-JAX reference (for verification) ------------------
def cnn_1d_reference(x, conv_w, conv_b, lin_w, lin_b):
    y = jax.lax.conv_general_dilated(
        x, conv_w, window_strides=(1,), padding=[(PAD, PAD)],
        dimension_numbers=("NCH", "OIH", "NCH"))
    y = y + conv_b[None, :, None]
    y = jnp.maximum(y, 0.0)
    y = y.reshape(B, CPRIME, K, LOUT).max(axis=2)          # MaxPool2d((K,1)) on (B,C,L)
    y = y.reshape(-1, CPRIME)
    z = jnp.maximum(y @ lin_w.T + lin_b, 0.0)
    return z


# ----------------------------- main ----------------------------------------------------
if __name__ == "__main__":
    key = jax.random.PRNGKey(0)
    kx, kcw, kcb, klw, klb = jax.random.split(key, 5)

    x = jax.random.normal(kx, (B, CIN, L), dtype=jnp.float32)

    # Deterministic parameter init (uniform +-1/sqrt(fan_in), like PyTorch defaults).
    bound_c = 1.0 / np.sqrt(CIN * K)
    conv_w = jax.random.uniform(kcw, (COUT, CIN, K), jnp.float32, -bound_c, bound_c)
    conv_b = jax.random.uniform(kcb, (COUT,), jnp.float32, -bound_c, bound_c)

    bound_l = 1.0 / np.sqrt(CPRIME)
    lin_w = jax.random.uniform(klw, (CONV1D_OUT, CPRIME), jnp.float32, -bound_l, bound_l)
    lin_b = jax.random.uniform(klb, (CONV1D_OUT,), jnp.float32, -bound_l, bound_l)

    out = cnn_1d_forward(x, conv_w, conv_b, lin_w, lin_b)
    out = jax.block_until_ready(out)

    ref = jax.block_until_ready(cnn_1d_reference(x, conv_w, conv_b, lin_w, lin_b))
    assert out.shape == (ROWS, CONV1D_OUT), out.shape
    np.testing.assert_allclose(np.asarray(out), np.asarray(ref), rtol=1e-5, atol=1e-5)

    print("KERNEL_OK")
</pallas_src>

<mosaic_0001>
module attributes {stable_mosaic.version = 11 : i64} {
  func.func @cnn1d_fused_kernel(%arg0: i32, %arg1: memref<2x32x16xf32, #tpu.memory_space<vmem>>, %arg2: memref<12x96xf32, #tpu.memory_space<vmem>>, %arg3: memref<12x1xf32, #tpu.memory_space<vmem>>, %arg4: memref<32x128xf32, #tpu.memory_space<vmem>>, %arg5: memref<1x128xf32, #tpu.memory_space<vmem>>, %arg6: memref<4x128xf32, #tpu.memory_space<vmem>>, %arg7: memref<96x32xf32, #tpu.memory_space<vmem>>) attributes {dimension_semantics = [#tpu.dimension_semantics<arbitrary>], iteration_bounds = array<i64: 1>, scalar_prefetch = 0 : i64, scratch_operands = 1 : i64, tpu.core_type = #tpu.core_type<tc>, window_params = [{pipeline_mode = #tpu.pipeline_mode<synchronous>, transform_indices = @transform_0, window_bounds = array<i64: 2, 32, 16>}, {pipeline_mode = #tpu.pipeline_mode<synchronous>, transform_indices = @transform_1, window_bounds = array<i64: 12, 96>}, {pipeline_mode = #tpu.pipeline_mode<synchronous>, transform_indices = @transform_2, window_bounds = array<i64: 12, 1>}, {pipeline_mode = #tpu.pipeline_mode<synchronous>, transform_indices = @transform_3, window_bounds = array<i64: 32, 128>}, {pipeline_mode = #tpu.pipeline_mode<synchronous>, transform_indices = @transform_4, window_bounds = array<i64: 1, 128>}, {pipeline_mode = #tpu.pipeline_mode<synchronous>, transform_indices = @transform_5, window_bounds = array<i64: 4, 128>}]} {
    %cst = arith.constant 0.000000e+00 : f32
    %0 = vector.broadcast %cst : f32 to vector<96x32xf32>
    %c0 = arith.constant 0 : index
    %c0_0 = arith.constant 0 : index
    %1 = vector.load %arg7[%c0, %c0_0] : memref<96x32xf32, #tpu.memory_space<vmem>>, vector<96x32xf32>
    tpu.vector_store %arg7[%c0, %c0_0], %0 {strides = array<i32>} : memref<96x32xf32, #tpu.memory_space<vmem>>, vector<96x32xf32>,
    %c0_1 = arith.constant 0 : index
    %c0_2 = arith.constant 0 : index
    %c0_3 = arith.constant 0 : index
    %2 = vector.load %arg1[%c0_1, %c0_2, %c0_3] : memref<2x32x16xf32, #tpu.memory_space<vmem>>, vector<1x32x15xf32>
    %3 = vector.shape_cast %2 : vector<1x32x15xf32> to vector<32x15xf32>
    %c0_4 = arith.constant 0 : index
    %c1 = arith.constant 1 : index
    %4 = vector.load %arg7[%c0_4, %c1] : memref<96x32xf32, #tpu.memory_space<vmem>>, vector<32x15xf32>
    tpu.vector_store %arg7[%c0_4, %c1], %3 {strides = array<i32>} : memref<96x32xf32, #tpu.memory_space<vmem>>, vector<32x15xf32>,
    %c1_5 = arith.constant 1 : index
    %c0_6 = arith.constant 0 : index
    %c0_7 = arith.constant 0 : index
    %5 = vector.load %arg1[%c1_5, %c0_6, %c0_7] : memref<2x32x16xf32, #tpu.memory_space<vmem>>, vector<1x32x15xf32>
    %6 = vector.shape_cast %5 : vector<1x32x15xf32> to vector<32x15xf32>
    %c0_8 = arith.constant 0 : index
    %c17 = arith.constant 17 : index
    %7 = vector.load %arg7[%c0_8, %c17] : memref<96x32xf32, #tpu.memory_space<vmem>>, vector<32x15xf32>
    tpu.vector_store %arg7[%c0_8, %c17], %6 {strides = array<i32>} : memref<96x32xf32, #tpu.memory_space<vmem>>, vector<32x15xf32>,
    %c0_9 = arith.constant 0 : index
    %c0_10 = arith.constant 0 : index
    %c0_11 = arith.constant 0 : index
    %8 = vector.load %arg1[%c0_9, %c0_10, %c0_11] : memref<2x32x16xf32, #tpu.memory_space<vmem>>, vector<1x32x16xf32>
    %9 = vector.shape_cast %8 : vector<1x32x16xf32> to vector<32x16xf32>
    %c32 = arith.constant 32 : index
    %c0_12 = arith.constant 0 : index
    %10 = vector.load %arg7[%c32, %c0_12] : memref<96x32xf32, #tpu.memory_space<vmem>>, vector<32x16xf32>
    tpu.vector_store %arg7[%c32, %c0_12], %9 {strides = array<i32>} : memref<96x32xf32, #tpu.memory_space<vmem>>, vector<32x16xf32>,
    %c1_13 = arith.constant 1 : index
    %c0_14 = arith.constant 0 : index
    %c0_15 = arith.constant 0 : index
    %11 = vector.load %arg1[%c1_13, %c0_14, %c0_15] : memref<2x32x16xf32, #tpu.memory_space<vmem>>, vector<1x32x16xf32>
    %12 = vector.shape_cast %11 : vector<1x32x16xf32> to vector<32x16xf32>
    %c32_16 = arith.constant 32 : index
    %c16 = arith.constant 16 : index
    %13 = vector.load %arg7[%c32_16, %c16] : memref<96x32xf32, #tpu.memory_space<vmem>>, vector<32x16xf32>
    tpu.vector_store %arg7[%c32_16, %c16], %12 {strides = array<i32>} : memref<96x32xf32, #tpu.memory_space<vmem>>, vector<32x16xf32>,
    %c0_17 = arith.constant 0 : index
    %c0_18 = arith.constant 0 : index
    %c1_19 = arith.constant 1 : index
    %14 = vector.load %arg1[%c0_17, %c0_18, %c1_19] : memref<2x32x16xf32, #tpu.memory_space<vmem>>, vector<1x32x15xf32>
    %15 = vector.shape_cast %14 : vector<1x32x15xf32> to vector<32x15xf32>
    %c64 = arith.constant 64 : index
    %c0_20 = arith.constant 0 : index
    %16 = vector.load %arg7[%c64, %c0_20] : memref<96x32xf32, #tpu.memory_space<vmem>>, vector<32x15xf32>
    tpu.vector_store %arg7[%c64, %c0_20], %15 {strides = array<i32>} : memref<96x32xf32, #tpu.memory_space<vmem>>, vector<32x15xf32>,
    %c1_21 = arith.constant 1 : index
    %c0_22 = arith.constant 0 : index
    %c1_23 = arith.constant 1 : index
    %17 = vector.load %arg1[%c1_21, %c0_22, %c1_23] : memref<2x32x16xf32, #tpu.memory_space<vmem>>, vector<1x32x15xf32>
    %18 = vector.shape_cast %17 : vector<1x32x15xf32> to vector<32x15xf32>
    %c64_24 = arith.constant 64 : index
    %c16_25 = arith.constant 16 : index
    %19 = vector.load %arg7[%c64_24, %c16_25] : memref<96x32xf32, #tpu.memory_space<vmem>>, vector<32x15xf32>
    tpu.vector_store %arg7[%c64_24, %c16_25], %18 {strides = array<i32>} : memref<96x32xf32, #tpu.memory_space<vmem>>, vector<32x15xf32>,
    %c0_26 = arith.constant 0 : index
    %c0_27 = arith.constant 0 : index
    %20 = vector.load %arg2[%c0_26, %c0_27] : memref<12x96xf32, #tpu.memory_space<vmem>>, vector<12x96xf32>
    %c0_28 = arith.constant 0 : index
    %c0_29 = arith.constant 0 : index
    %21 = vector.load %arg7[%c0_28, %c0_29] : memref<96x32xf32, #tpu.memory_space<vmem>>, vector<96x32xf32>
    %cst_30 = arith.constant dense<0.000000e+00> : vector<12x32xf32>
    %22 = tpu.matmul %20, %21, %cst_30 {dimension_numbers = #tpu.dot_dimension_numbers<[1], [0], [0], [1], [0, 0, 1, 1], [], []>} : vector<12x96xf32>, vector<96x32xf32>, vector<12x32xf32> -> vector<12x32xf32>
    %c0_31 = arith.constant 0 : index
    %c0_32 = arith.constant 0 : index
    %23 = vector.load %arg3[%c0_31, %c0_32] : memref<12x1xf32, #tpu.memory_space<vmem>>, vector<12x1xf32>
    %24 = vector.broadcast %23 : vector<12x1xf32> to vector<12x32xf32>
    %25 = arith.addf %22, %24 : vector<12x32xf32>
    %cst_33 = arith.constant 0.000000e+00 : f32
    %26 = vector.broadcast %cst_33 : f32 to vector<12x32xf32>
    %27 = arith.maximumf %25, %26 : vector<12x32xf32>
    %28 = vector.extract_strided_slice %27 {offsets = [0, 0], sizes = [4, 32], strides = [1, 1]} : vector<12x32xf32> to vector<4x32xf32>
    %29 = vector.extract_strided_slice %27 {offsets = [4, 0], sizes = [4, 32], strides = [1, 1]} : vector<12x32xf32> to vector<4x32xf32>
    %30 = arith.maximumf %28, %29 : vector<4x32xf32>
    %31 = vector.extract_strided_slice %27 {offsets = [8, 0], sizes = [4, 32], strides = [1, 1]} : vector<12x32xf32> to vector<4x32xf32>
    %32 = arith.maximumf %30, %31 : vector<4x32xf32>
    %c0_34 = arith.constant 0 : index
    %c0_35 = arith.constant 0 : index
    %33 = vector.load %arg4[%c0_34, %c0_35] : memref<32x128xf32, #tpu.memory_space<vmem>>, vector<32x128xf32>
    %cst_36 = arith.constant dense<0.000000e+00> : vector<4x128xf32>
    %34 = tpu.matmul %32, %33, %cst_36 {dimension_numbers = #tpu.dot_dimension_numbers<[1], [0], [0], [1], [0, 0, 1, 1], [], []>} : vector<4x32xf32>, vector<32x128xf32>, vector<4x128xf32> -> vector<4x128xf32>
    %c0_37 = arith.constant 0 : index
    %c0_38 = arith.constant 0 : index
    %35 = vector.load %arg5[%c0_37, %c0_38] : memref<1x128xf32, #tpu.memory_space<vmem>>, vector<1x128xf32>
    %36 = vector.broadcast %35 : vector<1x128xf32> to vector<4x128xf32>
    %37 = arith.addf %34, %36 : vector<4x128xf32>
    %cst_39 = arith.constant 0.000000e+00 : f32
    %38 = vector.broadcast %cst_39 : f32 to vector<4x128xf32>
    %39 = arith.maximumf %37, %38 : vector<4x128xf32>
    %c0_40 = arith.constant 0 : index
    %c0_41 = arith.constant 0 : index
    %40 = vector.load %arg6[%c0_40, %c0_41] : memref<4x128xf32, #tpu.memory_space<vmem>>, vector<4x128xf32>
    tpu.vector_store %arg6[%c0_40, %c0_41], %39 {strides = array<i32>} : memref<4x128xf32, #tpu.memory_space<vmem>>, vector<4x128xf32>,
    return
  }
  func.func @transform_0(%arg0: i32) -> (i32, i32, i32) {
    %c0_i32 = arith.constant 0 : i32
    %c0_i32_0 = arith.constant 0 : i32
    %c0_i32_1 = arith.constant 0 : i32
    %c0_i32_2 = arith.constant 0 : i32
    return %c0_i32, %c0_i32_0, %c0_i32_1 : i32, i32, i32
  }
  func.func @transform_1(%arg0: i32) -> (i32, i32) {
    %c0_i32 = arith.constant 0 : i32
    %c0_i32_0 = arith.constant 0 : i32
    %c0_i32_1 = arith.constant 0 : i32
    return %c0_i32, %c0_i32_0 : i32, i32
  }
  func.func @transform_2(%arg0: i32) -> (i32, i32) {
    %c0_i32 = arith.constant 0 : i32
    %c0_i32_0 = arith.constant 0 : i32
    %c0_i32_1 = arith.constant 0 : i32
    return %c0_i32, %c0_i32_0 : i32, i32
  }
  func.func @transform_3(%arg0: i32) -> (i32, i32) {
    %c0_i32 = arith.constant 0 : i32
    %c0_i32_0 = arith.constant 0 : i32
    %c0_i32_1 = arith.constant 0 : i32
    return %c0_i32, %c0_i32_0 : i32, i32
  }
  func.func @transform_4(%arg0: i32) -> (i32, i32) {
    %c0_i32 = arith.constant 0 : i32
    %c0_i32_0 = arith.constant 0 : i32
    %c0_i32_1 = arith.constant 0 : i32
    return %c0_i32, %c0_i32_0 : i32, i32
  }
  func.func @transform_5(%arg0: i32) -> (i32, i32) {
    %c0_i32 = arith.constant 0 : i32
    %c0_i32_0 = arith.constant 0 : i32
    %c0_i32_1 = arith.constant 0 : i32
    return %c0_i32, %c0_i32_0 : i32, i32
  }
}

</mosaic_0001>

<llo_original>
// kernel: tpu_custom_call.1
$region0: #{tpu_custom_call.1}
  #allocation0 [shape = 'u32[]', space=smem, size = 0x4, offset = 0x4, fixed_abs, tag = 'smem constant byte address 0x4 - core index']
  #allocation1 [shape = 'u32[144,128]{1,0:T(1,128)}', space=vmem, size = 0x12000, scoped, tag = 'internal scratch']
  #allocation2 [shape = 'f32[96,32]{1,0:T(8,128)}', space=vmem, size = 0xc000, scoped, tag = 'scratch operand']
  %s0 = inlined_call_operand.vmem [shape: f32[2,32,16], index: 0, kind: input, shape index: {}]
  %s1 = inlined_call_operand.vmem [shape: f32[12,96], index: 1, kind: input, shape index: {}]
  %s2 = inlined_call_operand.vmem [shape: f32[12,1], index: 2, kind: input, shape index: {}]
  %s3 = inlined_call_operand.vmem [shape: f32[32,128], index: 3, kind: input, shape index: {}]
  %s4 = inlined_call_operand.vmem [shape: f32[1,128], index: 4, kind: input, shape index: {}]
  %s5 = inlined_call_operand.hbm [shape: f32[4,128], index: 5, kind: output, shape index: {}]
  %s6 = sld [smem:[#allocation0]]
  $region30: #{tpu_custom_call.1} parent=0
    _
  %s8 = ssub.s32 1, %s6
  %s9 = scalar_select 0, %s8, %s6
  $region1: #{tpu_custom_call.1} parent=0
    #allocation3 [shape = 'u8[2048]{0}', space=vmem, size = 0x800, scoped, tag = 'output window, operand 0, single buffered']
    #allocation4 [shape = 's32[1]{0}', space=sflag, size = 0x4, scoped, tag = 'scoped memory for tpu_custom_call.1']
    %10 = vsyncpa [#allocation4], 0
    // Predicated region
    $region2: #{tpu_custom_call.1} parent=1 // pred_check
      _
    $region3: #{tpu_custom_call.1} parent=1 // pred_check_branch
      %12 = sbr.rel (0) target = $region5
    $region4: #{tpu_custom_call.1} parent=1 // pred_region
      _
    $region5: #{tpu_custom_call.1} parent=1 // pred_fallthru
      _
    // Predicated region
    $region6: #{tpu_custom_call.1} parent=1 // pred_check
      _
    $region7: #{tpu_custom_call.1} parent=1 // pred_check_branch
      %14 = sbr.rel (0) target = $region9
    $region8: #{tpu_custom_call.1} parent=1 // pred_region
      _
    $region9: #{tpu_custom_call.1} parent=1 // pred_fallthru
      _
    // Predicated region
    $region10: #{tpu_custom_call.1} parent=1 // pred_check
      _
    $region11: #{tpu_custom_call.1} parent=1 // pred_check_branch
      %16 = sbr.rel (0) target = $region13
    $region12: #{tpu_custom_call.1} parent=1 // pred_region
      _
    $region13: #{tpu_custom_call.1} parent=1 // pred_fallthru
      _
    // Predicated region
    $region14: #{tpu_custom_call.1} parent=1 // pred_check
      _
    $region15: #{tpu_custom_call.1} parent=1 // pred_check_branch
      %18 = sbr.rel (0) target = $region17
    $region16: #{tpu_custom_call.1} parent=1 // pred_region
      _
    $region17: #{tpu_custom_call.1} parent=1 // pred_fallthru
      _
    // Predicated region
    $region18: #{tpu_custom_call.1} parent=1 // pred_check
      _
    $region19: #{tpu_custom_call.1} parent=1 // pred_check_branch
      %20 = sbr.rel (0) target = $region21
    $region20: #{tpu_custom_call.1} parent=1 // pred_region
      _
    $region21: #{tpu_custom_call.1} parent=1 // pred_fallthru
      _
    %vm21 = vcmask 261120
    %22 = vst.msk [vmem:[#allocation2] sm:$0xff] %vm21, 0.0
    %23 = vst.msk [vmem:[#allocation2 + $0x8] sm:$0xff] %vm21, 0.0
    %24 = vst.msk [vmem:[#allocation2 + $0x10] sm:$0xff] %vm21, 0.0
    %25 = vst.msk [vmem:[#allocation2 + $0x18] sm:$0xff] %vm21, 0.0
    %26 = vst.msk [vmem:[#allocation2 + $0x20] sm:$0xff] %vm21, 0.0
    %27 = vst.msk [vmem:[#allocation2 + $0x28] sm:$0xff] %vm21, 0.0
    %28 = vst.msk [vmem:[#allocation2 + $0x30] sm:$0xff] %vm21, 0.0
    %29 = vst.msk [vmem:[#allocation2 + $0x38] sm:$0xff] %vm21, 0.0
    %30 = vst.msk [vmem:[#allocation2 + $0x40] sm:$0xff] %vm21, 0.0
    %31 = vst.msk [vmem:[#allocation2 + $0x48] sm:$0xff] %vm21, 0.0
    %32 = vst.msk [vmem:[#allocation2 + $0x50] sm:$0xff] %vm21, 0.0
    %33 = vst.msk [vmem:[#allocation2 + $0x58] sm:$0xff] %vm21, 0.0
    %v34 = vld [vmem:[%s0] sm:$0xff]
    %v35 = vld [vmem:[%s0 + $0x8] sm:$0xff]
    %v36 = vld [vmem:[%s0 + $0x10] sm:$0xff]
    %v37 = vld [vmem:[%s0 + $0x18] sm:$0xff]
    %42 = vrot.lane.b32.xlu0 %v34, 1
    %v43 = vpop.permute.xlu0 %42
    %44 = vrot.lane.b32.xlu0 %v35, 1
    %v45 = vpop.permute.xlu0 %44
    %46 = vrot.lane.b32.xlu0 %v36, 1
    %v47 = vpop.permute.xlu0 %46
    %48 = vrot.lane.b32.xlu0 %v37, 1
    %v49 = vpop.permute.xlu0 %48
    %vm54 = vcmask 130056
    %55 = vst.msk [vmem:[#allocation2] sm:$0xff] %vm54, %v43
    %56 = vst.msk [vmem:[#allocation2 + $0x8] sm:$0xff] %vm54, %v45
    %57 = vst.msk [vmem:[#allocation2 + $0x10] sm:$0xff] %vm54, %v47
    %58 = vst.msk [vmem:[#allocation2 + $0x18] sm:$0xff] %vm54, %v49
    %s59 = scalar_lea.vmem %s0, 32
    %v60 = vld [vmem:[%s59] sm:$0xff]
    %v61 = vld [vmem:[%s59 + $0x8] sm:$0xff]
    %v62 = vld [vmem:[%s59 + $0x10] sm:$0xff]
    %v63 = vld [vmem:[%s59 + $0x18] sm:$0xff]
    %68 = vrot.lane.b32.xlu0 %v60, 17
    %v69 = vpop.permute.xlu0 %68
    %70 = vrot.lane.b32.xlu0 %v61, 17
    %v71 = vpop.permute.xlu0 %70
    %72 = vrot.lane.b32.xlu0 %v62, 17
    %v73 = vpop.permute.xlu0 %72
    %74 = vrot.lane.b32.xlu0 %v63, 17
    %v75 = vpop.permute.xlu0 %74
    %vm80 = vcmask 261256
    %81 = vst.msk [vmem:[#allocation2] sm:$0xff] %vm80, %v69
    %82 = vst.msk [vmem:[#allocation2 + $0x8] sm:$0xff] %vm80, %v71
    %83 = vst.msk [vmem:[#allocation2 + $0x10] sm:$0xff] %vm80, %v73
    %84 = vst.msk [vmem:[#allocation2 + $0x18] sm:$0xff] %vm80, %v75
    %v85 = vld [vmem:[%s0] sm:$0xff]
    %v86 = vld [vmem:[%s0 + $0x8] sm:$0xff]
    %v87 = vld [vmem:[%s0 + $0x10] sm:$0xff]
    %v88 = vld [vmem:[%s0 + $0x18] sm:$0xff]
    %vm89 = vcmask 130048
    %90 = vst.msk [vmem:[#allocation2 + $0x20] sm:$0xff] %vm89, %v85
    %91 = vst.msk [vmem:[#allocation2 + $0x28] sm:$0xff] %vm89, %v86
    %92 = vst.msk [vmem:[#allocation2 + $0x30] sm:$0xff] %vm89, %v87
    %93 = vst.msk [vmem:[#allocation2 + $0x38] sm:$0xff] %vm89, %v88
    %v94 = vld [vmem:[%s59] sm:$0xff]
    %v95 = vld [vmem:[%s59 + $0x8] sm:$0xff]
    %v96 = vld [vmem:[%s59 + $0x10] sm:$0xff]
    %v97 = vld [vmem:[%s59 + $0x18] sm:$0xff]
    %102 = vrot.lane.b32.xlu0 %v94, 16
    %v103 = vpop.permute.xlu0 %102
    %104 = vrot.lane.b32.xlu0 %v95, 16
    %v105 = vpop.permute.xlu0 %104
    %106 = vrot.lane.b32.xlu0 %v96, 16
    %v107 = vpop.permute.xlu0 %106
    %108 = vrot.lane.b32.xlu0 %v97, 16
    %v109 = vpop.permute.xlu0 %108
    %vm114 = vcmask 261248
    %115 = vst.msk [vmem:[#allocation2 + $0x20] sm:$0xff] %vm114, %v103
    %116 = vst.msk [vmem:[#allocation2 + $0x28] sm:$0xff] %vm114, %v105
    %117 = vst.msk [vmem:[#allocation2 + $0x30] sm:$0xff] %vm114, %v107
    %118 = vst.msk [vmem:[#allocation2 + $0x38] sm:$0xff] %vm114, %v109
    %v119 = vld [vmem:[%s0] sm:$0xff]
    %v120 = vld [vmem:[%s0 + $0x8] sm:$0xff]
    %v121 = vld [vmem:[%s0 + $0x10] sm:$0xff]
    %v122 = vld [vmem:[%s0 + $0x18] sm:$0xff]
    %127 = vrot.lane.b32.xlu0 %v119, 127
    %v128 = vpop.permute.xlu0 %127
    %129 = vrot.lane.b32.xlu0 %v120, 127
    %v130 = vpop.permute.xlu0 %129
    %131 = vrot.lane.b32.xlu0 %v121, 127
    %v132 = vpop.permute.xlu0 %131
    %133 = vrot.lane.b32.xlu0 %v122, 127
    %v134 = vpop.permute.xlu0 %133
    %vm139 = vcmask 121856
    %140 = vst.msk [vmem:[#allocation2 + $0x40] sm:$0xff] %vm139, %v128
    %141 = vst.msk [vmem:[#allocation2 + $0x48] sm:$0xff] %vm139, %v130
    %142 = vst.msk [vmem:[#allocation2 + $0x50] sm:$0xff] %vm139, %v132
    %143 = vst.msk [vmem:[#allocation2 + $0x58] sm:$0xff] %vm139, %v134
    %v144 = vld [vmem:[%s59] sm:$0xff]
    %v145 = vld [vmem:[%s59 + $0x8] sm:$0xff]
    %v146 = vld [vmem:[%s59 + $0x10] sm:$0xff]
    %v147 = vld [vmem:[%s59 + $0x18] sm:$0xff]
    %152 = vrot.lane.b32.xlu0 %v144, 15
    %v153 = vpop.permute.xlu0 %152
    %154 = vrot.lane.b32.xlu0 %v145, 15
    %v155 = vpop.permute.xlu0 %154
    %156 = vrot.lane.b32.xlu0 %v146, 15
    %v157 = vpop.permute.xlu0 %156
    %158 = vrot.lane.b32.xlu0 %v147, 15
    %v159 = vpop.permute.xlu0 %158
    %vm164 = vcmask 253056
    %165 = vst.msk [vmem:[#allocation2 + $0x40] sm:$0xff] %vm164, %v153
    %166 = vst.msk [vmem:[#allocation2 + $0x48] sm:$0xff] %vm164, %v155
    %167 = vst.msk [vmem:[#allocation2 + $0x50] sm:$0xff] %vm164, %v157
    %168 = vst.msk [vmem:[#allocation2 + $0x58] sm:$0xff] %vm164, %v159
    %v169 = vld [vmem:[%s1] sm:$0xff]
    %v170 = vld [vmem:[%s1 + $0x8] sm:$0xf]
    %v171 = vld [vmem:[#allocation2] sm:$0xff]
    %v172 = vld [vmem:[#allocation2 + $0x8] sm:$0xff]
    %v173 = vld [vmem:[#allocation2 + $0x10] sm:$0xff]
    %v174 = vld [vmem:[#allocation2 + $0x18] sm:$0xff]
    %v175 = vld [vmem:[#allocation2 + $0x20] sm:$0xff]
    %v176 = vld [vmem:[#allocation2 + $0x28] sm:$0xff]
    %v177 = vld [vmem:[#allocation2 + $0x30] sm:$0xff]
    %v178 = vld [vmem:[#allocation2 + $0x38] sm:$0xff]
    %v179 = vld [vmem:[#allocation2 + $0x40] sm:$0xff]
    %v180 = vld [vmem:[#allocation2 + $0x48] sm:$0xff]
    %v181 = vld [vmem:[#allocation2 + $0x50] sm:$0xff]
    %v182 = vld [vmem:[#allocation2 + $0x58] sm:$0xff]
    %v183 = vld [vmem:[%s2] sm:$0xff]
    %v184 = vld [vmem:[%s2 + $0x8] sm:$0xf]
    %186 = vset.pattern.permute.xlu0 0
    %187 = vperm.xlu0 %186, %v183
    %v188 = vpop.permute.xlu0 %187
    %191 = vset.pattern.permute.xlu0 0
    %192 = vperm.xlu0 %191, %v184
    %v193 = vpop.permute.xlu0 %192
    %vm195 = vcmask 785408
    %v197 = vsel %vm195, %v169, 0
    %v200 = vsel %vm195, %v170, 0
    %202 = vmatprep.subr.mxu0 0.0
    %203 = vmatpush1.msra.mxu0 0.0
    %204 = vmatprep.subr.mxu0 0.0
    %205 = vmatpush1.msra.mxu0 0.0
    %206 = vmatprep.subr.mxu0 0.0
    %207 = vmatpush1.msra.mxu0 0.0
    %208 = vmatprep.subr.mxu0 0.0
    %209 = vmatpush1.msra.mxu0 0.0
    %210 = vmatprep.subr.mxu0 0.0
    %211 = vmatpush1.msra.mxu0 %v182
    %212 = vmatprep.subr.mxu0 0.0
    %213 = vmatpush1.msra.mxu0 %v181
    %214 = vmatprep.subr.mxu0 0.0
    %215 = vmatpush1.msra.mxu0 %v180
    %216 = vmatprep.subr.mxu0 0.0
    %217 = vmatpush1.msra.mxu0 %v179
    %218 = vmatprep.subr.mxu0 0.0
    %219 = vmatpush1.msra.mxu0 %v178
    %220 = vmatprep.subr.mxu0 0.0
    %221 = vmatpush1.msra.mxu0 %v177
    %222 = vmatprep.subr.mxu0 0.0
    %223 = vmatpush1.msra.mxu0 %v176
    %224 = vmatprep.subr.mxu0 0.0
    %225 = vmatpush1.msra.mxu0 %v175
    %226 = vmatprep.subr.mxu0 0.0
    %227 = vmatpush1.msra.mxu0 %v174
    %228 = vmatprep.subr.mxu0 0.0
    %229 = vmatpush1.msra.mxu0 %v173
    %230 = vmatprep.subr.mxu0 0.0
    %231 = vmatpush1.msra.mxu0 %v172
    %232 = vmatprep.subr.mxu0 0.0
    %233 = vmatpush1.msra.mxu0 %v171
    %234 = vmatprep.subr.mxu0 0.0
    %235 = vmatpush2.msra.mxu0 0.0
    %236 = vmatprep.subr.mxu0 0.0
    %237 = vmatpush2.msra.mxu0 0.0
    %238 = vmatprep.subr.mxu0 0.0
    %239 = vmatpush2.msra.mxu0 0.0
    %240 = vmatprep.subr.mxu0 0.0
    %241 = vmatpush2.msra.mxu0 0.0
    %242 = vmatprep.subr.mxu0 0.0
    %243 = vmatpush2.msra.mxu0 0.0
    %244 = vmatprep.subr.mxu0 0.0
    %245 = vmatpush2.msra.mxu0 0.0
    %246 = vmatprep.subr.mxu0 0.0
    %247 = vmatpush2.msra.mxu0 0.0
    %248 = vmatprep.subr.mxu0 0.0
    %249 = vmatpush2.msra.mxu0 0.0
    %250 = vmatprep.subr.mxu0 0.0
    %251 = vmatpush2.msra.mxu0 0.0
    %252 = vmatprep.subr.mxu0 0.0
    %253 = vmatpush2.msra.mxu0 0.0
    %254 = vmatprep.subr.mxu0 0.0
    %255 = vmatpush2.msra.mxu0 0.0
    %256 = vmatprep.subr.mxu0 0.0
    %257 = vmatpush2.msra.mxu0 0.0
    %258 = vmatprep.subr.mxu0 0.0
    %259 = vmatpush2.msra.mxu0 0.0
    %260 = vmatprep.subr.mxu0 0.0
    %261 = vmatpush2.msra.mxu0 0.0
    %262 = vmatprep.subr.mxu0 0.0
    %263 = vmatpush2.msra.mxu0 0.0
    %264 = vmatprep.subr.mxu0 0.0
    %265 = vmatpush2.msra.mxu0 0.0
    %266 = vmatprep.mubr.f32.mxu0 0.0
    %267 = vmatmul.mubr.f32.gmra.mxu0 %v197
    %v268 = vpop.f32.mrf.mxu0
    %v269 = vadd.f32 %v188, %v268
    %v270 = vpop.f32.mrf.mxu0
    %271 = vmatprep.mubr.f32.mxu0 0.0
    %272 = vmatmul.mubr.f32.gmra.mxu0 %v200
    %v273 = vpop.f32.mrf.mxu0
    %v274 = vadd.f32 %v193, %v273
    %v275 = vpop.f32.mrf.mxu0
    %276 = vdwg.mxu0
    %v277 = vmax.f32 %v269, 0.0
    %v278 = vmax.f32 %v274, 0.0
    %v280 = vrot.slane %v277, 4
    %v282 = vmax.f32 %v277, %v280
    %v283 = vmax.f32 %v282, %v278
    %v284 = vld [vmem:[%s3] sm:$0xff]
    %v285 = vld [vmem:[%s3 + $0x8] sm:$0xff]
    %v286 = vld [vmem:[%s3 + $0x10] sm:$0xff]
    %v287 = vld [vmem:[%s3 + $0x18] sm:$0xff]
    %v288 = vld [vmem:[%s4] sm:$0x1]
    %v290 = vlaneseq
    %v291 = vshrl.u32 %v290, 7
    %v292 = vsub.s32 0, %v291
    %v293 = vrot.slane %v288, %v292
    %v296 = vsel %vm21, %v283, 0
    %298 = vmatprep.subr.mxu0 0.0
    %299 = vmatpush1.msra.mxu0 0.0
    %300 = vmatprep.subr.mxu0 0.0
    %301 = vmatpush1.msra.mxu0 0.0
    %302 = vmatprep.subr.mxu0 0.0
    %303 = vmatpush1.msra.mxu0 0.0
    %304 = vmatprep.subr.mxu0 0.0
    %305 = vmatpush1.msra.mxu0 0.0
    %306 = vmatprep.subr.mxu0 0.0
    %307 = vmatpush1.msra.mxu0 0.0
    %308 = vmatprep.subr.mxu0 0.0
    %309 = vmatpush1.msra.mxu0 0.0
    %310 = vmatprep.subr.mxu0 0.0
    %311 = vmatpush1.msra.mxu0 0.0
    %312 = vmatprep.subr.mxu0 0.0
    %313 = vmatpush1.msra.mxu0 0.0
    %314 = vmatprep.subr.mxu0 0.0
    %315 = vmatpush1.msra.mxu0 0.0
    %316 = vmatprep.subr.mxu0 0.0
    %317 = vmatpush1.msra.mxu0 0.0
    %318 = vmatprep.subr.mxu0 0.0
    %319 = vmatpush1.msra.mxu0 0.0
    %320 = vmatprep.subr.mxu0 0.0
    %321 = vmatpush1.msra.mxu0 0.0
    %322 = vmatprep.subr.mxu0 0.0
    %323 = vmatpush1.msra.mxu0 %v287
    %324 = vmatprep.subr.mxu0 0.0
    %325 = vmatpush1.msra.mxu0 %v286
    %326 = vmatprep.subr.mxu0 0.0
    %327 = vmatpush1.msra.mxu0 %v285
    %328 = vmatprep.subr.mxu0 0.0
    %329 = vmatpush1.msra.mxu0 %v284
    %330 = vmatprep.subr.mxu0 0.0
    %331 = vmatpush2.msra.mxu0 0.0
    %332 = vmatprep.subr.mxu0 0.0
    %333 = vmatpush2.msra.mxu0 0.0
    %334 = vmatprep.subr.mxu0 0.0
    %335 = vmatpush2.msra.mxu0 0.0
    %336 = vmatprep.subr.mxu0 0.0
    %337 = vmatpush2.msra.mxu0 0.0
    %338 = vmatprep.subr.mxu0 0.0
    %339 = vmatpush2.msra.mxu0 0.0
    %340 = vmatprep.subr.mxu0 0.0
    %341 = vmatpush2.msra.mxu0 0.0
    %342 = vmatprep.subr.mxu0 0.0
    %343 = vmatpush2.msra.mxu0 0.0
    %344 = vmatprep.subr.mxu0 0.0
    %345 = vmatpush2.msra.mxu0 0.0
    %346 = vmatprep.subr.mxu0 0.0
    %347 = vmatpush2.msra.mxu0 0.0
    %348 = vmatprep.subr.mxu0 0.0
    %349 = vmatpush2.msra.mxu0 0.0
    %350 = vmatprep.subr.mxu0 0.0
    %351 = vmatpush2.msra.mxu0 0.0
    %352 = vmatprep.subr.mxu0 0.0
    %353 = vmatpush2.msra.mxu0 0.0
    %354 = vmatprep.subr.mxu0 0.0
    %355 = vmatpush2.msra.mxu0 0.0
    %356 = vmatprep.subr.mxu0 0.0
    %357 = vmatpush2.msra.mxu0 0.0
    %358 = vmatprep.subr.mxu0 0.0
    %359 = vmatpush2.msra.mxu0 0.0
    %360 = vmatprep.subr.mxu0 0.0
    %361 = vmatpush2.msra.mxu0 0.0
    %362 = vmatprep.mubr.f32.mxu0 0.0
    %363 = vmatmul.mubr.f32.gmra.mxu0 %v296
    %v364 = vpop.f32.mrf.mxu0
    %v365 = vadd.f32 %v293, %v364
    %v366 = vpop.f32.mrf.mxu0
    %367 = vdwg.mxu0
    %v368 = vmax.f32 %v365, 0.0
    %369 = vst [vmem:[#allocation3] sm:$0xf] %v368
    // Predicated region
    $region22: #{tpu_custom_call.1} parent=1 // pred_check
      _
    $region23: #{tpu_custom_call.1} parent=1 // pred_check_branch
      %371 = sbr.rel (0) target = $region25
    $region24: #{tpu_custom_call.1} parent=1 // pred_region
      %s373 = ssub.s32 64, 64
      %374 = vsyncadd [#allocation4], %s373
      %s376 = sshll.u32 [#allocation3], 4
      %s377 = int_to_ptr.vmem [resolvable:$true] %s376
      %379 = dma.vmem_to_hbm [thread:$0]  %s377, 64, %s5, [#allocation4]
    $region25: #{tpu_custom_call.1} parent=1 // pred_fallthru
      _
    // Predicated region
    $region26: #{tpu_custom_call.1} parent=1 // pred_check
      _
    $region27: #{tpu_custom_call.1} parent=1 // pred_check_branch
      %381 = sbr.rel (0) target = $region29
    $region28: #{tpu_custom_call.1} parent=1 // pred_region
      %382 = dma.done [#allocation4], 64
    $region29: #{tpu_custom_call.1} parent=1 // pred_fallthru
      _
    %383 = vsyncpa [#allocation4], 1

</llo_original>
